<compile_context>
chip_gen: v6e
topology: v6e:2x2x1
jax: 0.10.0
libtpu: 0.0.40
codegen_flags: <defaults>
</compile_context>

<pallas_src>
import functools

import numpy as np
import jax
import jax.numpy as jnp
from jax.experimental import pallas as pl
from jax.experimental.pallas import tpu as pltpu

# `landmark_classes` is a module-level global in the original file; use the
# standard 68-point facial-landmark grouping (jaw, brows, nose, eyes, mouth).
LANDMARK_CLASSES = [
    list(range(0, 17)),    # jaw
    list(range(17, 22)),   # left eyebrow
    list(range(22, 27)),   # right eyebrow
    list(range(27, 31)),   # nose bridge
    list(range(31, 36)),   # lower nose
    list(range(36, 42)),   # left eye
    list(range(42, 48)),   # right eye
    list(range(48, 60)),   # outer mouth
    list(range(60, 68)),   # inner mouth
]
N_LANDMARKS = 68
N_COORDS = 3
N_CLASSES = len(LANDMARK_CLASSES)
WIDTH = N_LANDMARKS * N_COORDS        # 204 interleaved lanes per (b, t) row
N_COLS = 128                          # padded (class, coord) column count
MAX_TILE = 1024                       # rows/tile (multiple of 8)


def _cdiv(a, b):
    return -(-a // b)


def _round_up(a, b):
    return _cdiv(a, b) * b


def _num_tensorcores():
    """2 on multi-TensorCore parts (v4/v5p/v7x), 1 on v5e/v6e; safe fallback 1."""
    try:
        kind = jax.devices()[0].device_kind.lower()
    except Exception:
        return 1
    for tag in ("v4", "v5p", "v7"):
        if tag in kind:
            return 2
    return 1


@functools.lru_cache(maxsize=8)
def _build_tables(n_rows, lambda_classes):
    """Static 0/1 mask matrix + closed-form per-column / per-lane weights.

    Closed form (reproduces the original's in-place-centering quirk):
        d_l = diff_l*mask_l - c,  c = 68*P/cl^2,  P = sum_l pred_l*mask_l
        sum_l d^2 = Q - (136/cl^2)*P*D + (68^3/cl^4)*P^2
    with Q, D the masked sums of diff^2 and diff.  Q and mse_total fold into a
    per-lane weight (w_q); the P*D and P^2 terms get per-column weights (w_a, w_b).
    """
    mask = np.zeros((WIDTH, N_COLS), np.float32)
    w_a = np.zeros((N_COLS,), np.float32)                       # P*D coefficient
    w_b = np.zeros((N_COLS,), np.float32)                       # P^2 coefficient
    w_q = np.full((WIDTH,), 1.0 / (n_rows * WIDTH), np.float32)  # mse_total + Q
    for ci, idx in enumerate(LANDMARK_CLASSES):
        cl = float(len(idx))
        # weight of this class' summed d^2 in the final loss:
        #   lambda * (1/n_classes) * 1/(B*T*3*cl)
        w_cls = lambda_classes / (N_CLASSES * n_rows * N_COORDS * cl)
        for k in range(N_COORDS):
            col = ci * N_COORDS + k
            for l in idx:
                mask[N_COORDS * l + k, col] = 1.0
                w_q[N_COORDS * l + k] += w_cls
            w_a[col] = w_cls * (2.0 * N_LANDMARKS) / (cl * cl)
            w_b[col] = w_cls * (float(N_LANDMARKS) ** 3) / (cl ** 4)
    return mask, w_a, w_b, w_q


def _loss_kernel(x_ref, y_ref, m_ref, acc_pp_ref, acc_pd_ref, acc_q_ref,
                 *, tile, tiles_per_core, n_rows, ragged):
    # Zero the per-core resident accumulators at the start of each core's range.
    @pl.when(pl.program_id(1) == 0)
    def _init():
        acc_pp_ref[...] = jnp.zeros_like(acc_pp_ref)
        acc_pd_ref[...] = jnp.zeros_like(acc_pd_ref)
        acc_q_ref[...] = jnp.zeros_like(acc_q_ref)

    x_raw = x_ref[...]                       # (tile, 204), incoming dtype
    y_raw = y_ref[...]
    x = x_raw.astype(jnp.float32)
    y = y_raw.astype(jnp.float32)
    diff = x - y
    m = m_ref[...]                           # (204, 128) bf16 0/1 matrix

    if x_raw.dtype == jnp.bfloat16 and y_raw.dtype == jnp.bfloat16:
        # bf16 x {0,1} with f32 accumulation is exact: single-pass MXU dots.
        p = jnp.dot(x_raw, m, preferred_element_type=jnp.float32)
        d = p - jnp.dot(y_raw, m, preferred_element_type=jnp.float32)
    else:
        # f32 path: manual 2-term bf16 split at DEFAULT precision.  The mask is
        # 0/1 (bf16-exact), so the hi/lo partial products are exact and the f32
        # accumulation recovers ~f32 accuracy with 2 MXU passes per operand.
        x_hi = x.astype(jnp.bfloat16)
        x_lo = (x - x_hi.astype(jnp.float32)).astype(jnp.bfloat16)
        d_hi = diff.astype(jnp.bfloat16)
        d_lo = (diff - d_hi.astype(jnp.float32)).astype(jnp.bfloat16)
        p = (jnp.dot(x_hi, m, preferred_element_type=jnp.float32)
             + jnp.dot(x_lo, m, preferred_element_type=jnp.float32))
        d = (jnp.dot(d_hi, m, preferred_element_type=jnp.float32)
             + jnp.dot(d_lo, m, preferred_element_type=jnp.float32))

    pp = p * p                               # (tile, 128) raw P^2 terms
    pd = p * d                               # (tile, 128) raw P*D terms
    qq = diff * diff                         # (tile, 204) raw diff^2 terms

    base = (pl.program_id(0) * tiles_per_core + pl.program_id(1)) * tile

    def accumulate(apply_row_mask):
        pp_t, pd_t, qq_t = pp, pd, qq
        if apply_row_mask:
            row_ids = base + jax.lax.broadcasted_iota(jnp.int32, (tile, 1), 0)
            valid = row_ids < n_rows
            # Must remain a select (NOT a 0/1 multiply): out-of-range rows may
            # hold uninitialized VMEM (possible NaN/Inf).
            pp_t = jnp.where(valid, pp_t, 0.0)
            pd_t = jnp.where(valid, pd_t, 0.0)
            qq_t = jnp.where(valid, qq_t, 0.0)
        # Reduce the sublane axis in groups of 8 (pure VALU adds, no XLU lane
        # reductions) and accumulate into the resident output blocks.
        acc_pp_ref[...] += jnp.sum(pp_t.reshape(tile // 8, 8, N_COLS), axis=0)
        acc_pd_ref[...] += jnp.sum(pd_t.reshape(tile // 8, 8, N_COLS), axis=0)
        acc_q_ref[...] += jnp.sum(qq_t.reshape(tile // 8, 8, WIDTH), axis=0)

    if not ragged:
        accumulate(False)                    # no partial tiles exist: no masking
    else:
        is_partial = base + tile > n_rows    # only the clamped/partial tile masks

        @pl.when(is_partial)
        def _():
            accumulate(True)

        @pl.when(jnp.logical_not(is_partial))
        def _():
            accumulate(False)


def loss_for_content_predicted_landmarks(pred, true, lambda_classes=1.0):
    b, t = pred.shape[0], pred.shape[1]
    # (B, T, 204) and (B, T, 68, 3) are bit-identical in row-major order, so both
    # can be viewed as (B*T, 204) interleaved rows with NO transpose and NO copy.
    x2d = pred.reshape(b * t, WIDTH)
    y2d = true.reshape(b * t, WIDTH)
    n = b * t

    # Tile derived from n (not n / core_split), multiple of 8, capped for VMEM.
    tile = min(MAX_TILE, _round_up(max(n, 1), 8))
    n_tiles = _cdiv(n, tile)
    core_split = max(1, min(_num_tensorcores(), n_tiles))
    tiles_per_core = _cdiv(n_tiles, core_split)
    ragged = (core_split * tiles_per_core * tile) != n

    mask_np, wa_np, wb_np, wq_np = _build_tables(n, float(lambda_classes))
    mask = jnp.asarray(mask_np, dtype=jnp.bfloat16)   # 0/1, exact in bf16

    def data_map(c, j):
        # Clamp so a trailing fully-out-of-range logical tile re-reads the last
        # real block instead of issuing an OOB DMA; the kernel row mask zeroes it.
        return (jnp.minimum(c * tiles_per_core + j, n_tiles - 1), 0)

    kernel = functools.partial(_loss_kernel, tile=tile,
                               tiles_per_core=tiles_per_core,
                               n_rows=n, ragged=ragged)

    acc_pp, acc_pd, acc_q = pl.pallas_call(
        kernel,
        grid=(core_split, tiles_per_core),
        in_specs=[
            pl.BlockSpec((tile, WIDTH), data_map),                 # pred rows
            pl.BlockSpec((tile, WIDTH), data_map),                 # true rows
            pl.BlockSpec((WIDTH, N_COLS), lambda c, j: (0, 0)),    # class/coord mask
        ],
        out_specs=[
            pl.BlockSpec((8, N_COLS), lambda c, j: (c, 0)),        # Σ P^2
            pl.BlockSpec((8, N_COLS), lambda c, j: (c, 0)),        # Σ P·D
            pl.BlockSpec((8, WIDTH), lambda c, j: (c, 0)),         # Σ diff^2
        ],
        out_shape=[
            jax.ShapeDtypeStruct((core_split * 8, N_COLS), jnp.float32),
            jax.ShapeDtypeStruct((core_split * 8, N_COLS), jnp.float32),
            jax.ShapeDtypeStruct((core_split * 8, WIDTH), jnp.float32),
        ],
        compiler_params=pltpu.CompilerParams(
            dimension_semantics=("parallel", "arbitrary"),
            vmem_limit_bytes=32 * 1024 * 1024),
    )(x2d, y2d, mask)

    # Apply the (hoisted) closed-form weights once to the tiny accumulators.
    pp = jnp.sum(acc_pp, axis=0)    # (128,)
    pd = jnp.sum(acc_pd, axis=0)    # (128,)
    qq = jnp.sum(acc_q, axis=0)     # (204,)
    return (jnp.dot(jnp.asarray(wb_np), pp)
            - jnp.dot(jnp.asarray(wa_np), pd)
            + jnp.dot(jnp.asarray(wq_np), qq))


def _reference(pred, true, lambda_classes=1.0):
    """Pure-JAX transcription of the PyTorch forward (incl. the in-place
    centering quirk of the original), used for verification."""
    b, t = pred.shape[0], pred.shape[1]
    pred = pred.reshape(b, t, N_LANDMARKS, N_COORDS).astype(jnp.float32)
    true = true.reshape(b, t, N_LANDMARKS, N_COORDS).astype(jnp.float32)

    mse_total = jnp.mean((pred - true) ** 2)
    losses = []
    for idx in LANDMARK_CLASSES:
        cl = float(len(idx))
        mask = jnp.zeros_like(pred).at[:, :, jnp.asarray(idx), :].add(1.0)
        p = pred * mask
        tr = true * mask
        p = p - jnp.sum(p, axis=2, keepdims=True) / cl
        tr = tr - jnp.sum(p, axis=2, keepdims=True) / cl   # quirk of the original
        losses.append(jnp.sum((p - tr) ** 2) / jnp.sum(mask))
    return mse_total + lambda_classes * jnp.mean(jnp.stack(losses))


if __name__ == "__main__":
    key = jax.random.PRNGKey(0)
    k1, k2 = jax.random.split(key)
    B, T = 2, 8
    # 3-D inputs (B, T, 204) exercise the reshape-to-(B, T, 68, 3) path.
    pred = jax.random.normal(k1, (B, T, N_LANDMARKS * N_COORDS), jnp.float32)
    true = jax.random.normal(k2, (B, T, N_LANDMARKS * N_COORDS), jnp.float32)

    out = loss_for_content_predicted_landmarks(pred, true, lambda_classes=1.0)
    out = jax.block_until_ready(out)

    ref = jax.block_until_ready(_reference(pred, true, lambda_classes=1.0))
    assert jnp.allclose(out, ref, rtol=1e-4, atol=1e-4), (out, ref)
    print("KERNEL_OK")
</pallas_src>

<mosaic_0001>
module attributes {stable_mosaic.version = 11 : i64} {
  func.func @_loss_kernel(%arg0: i32, %arg1: i32, %arg2: memref<16x204xf32, #tpu.memory_space<vmem>>, %arg3: memref<16x204xf32, #tpu.memory_space<vmem>>, %arg4: memref<204x128xbf16, #tpu.memory_space<vmem>>, %arg5: memref<8x128xf32, #tpu.memory_space<vmem>>, %arg6: memref<8x128xf32, #tpu.memory_space<vmem>>, %arg7: memref<8x204xf32, #tpu.memory_space<vmem>>) attributes {dimension_semantics = [#tpu.dimension_semantics<parallel>, #tpu.dimension_semantics<arbitrary>], iteration_bounds = array<i64: 1, 1>, scalar_prefetch = 0 : i64, scratch_operands = 0 : i64, tpu.core_type = #tpu.core_type<tc>, window_params = [{transform_indices = @transform_0, window_bounds = array<i64: 16, 204>}, {transform_indices = @transform_1, window_bounds = array<i64: 16, 204>}, {pipeline_mode = #tpu.pipeline_mode<synchronous>, transform_indices = @transform_2, window_bounds = array<i64: 204, 128>}, {transform_indices = @transform_3, window_bounds = array<i64: 8, 128>}, {transform_indices = @transform_4, window_bounds = array<i64: 8, 128>}, {transform_indices = @transform_5, window_bounds = array<i64: 8, 204>}]} {
    %c0_i32 = arith.constant 0 : i32
    %0 = arith.cmpi eq, %arg1, %c0_i32 : i32
    %1 = arith.extui %0 : i1 to i32
    %c0_i32_0 = arith.constant 0 : i32
    %2 = arith.cmpi ne, %1, %c0_i32_0 : i32
    scf.if %2 {
      %cst_24 = arith.constant 0.000000e+00 : f32
      %39 = vector.broadcast %cst_24 : f32 to vector<8x128xf32>
      %c0_25 = arith.constant 0 : index
      %c0_26 = arith.constant 0 : index
      %40 = vector.load %arg5[%c0_25, %c0_26] : memref<8x128xf32, #tpu.memory_space<vmem>>, vector<8x128xf32>
      tpu.vector_store %arg5[%c0_25, %c0_26], %39 {strides = array<i32>} : memref<8x128xf32, #tpu.memory_space<vmem>>, vector<8x128xf32>,
      %cst_27 = arith.constant 0.000000e+00 : f32
      %41 = vector.broadcast %cst_27 : f32 to vector<8x128xf32>
      %c0_28 = arith.constant 0 : index
      %c0_29 = arith.constant 0 : index
      %42 = vector.load %arg6[%c0_28, %c0_29] : memref<8x128xf32, #tpu.memory_space<vmem>>, vector<8x128xf32>
      tpu.vector_store %arg6[%c0_28, %c0_29], %41 {strides = array<i32>} : memref<8x128xf32, #tpu.memory_space<vmem>>, vector<8x128xf32>,
      %cst_30 = arith.constant 0.000000e+00 : f32
      %43 = vector.broadcast %cst_30 : f32 to vector<8x204xf32>
      %c0_31 = arith.constant 0 : index
      %c0_32 = arith.constant 0 : index
      %44 = vector.load %arg7[%c0_31, %c0_32] : memref<8x204xf32, #tpu.memory_space<vmem>>, vector<8x204xf32>
      tpu.vector_store %arg7[%c0_31, %c0_32], %43 {strides = array<i32>} : memref<8x204xf32, #tpu.memory_space<vmem>>, vector<8x204xf32>,
    } else {
    }
    %c0 = arith.constant 0 : index
    %c0_1 = arith.constant 0 : index
    %3 = vector.load %arg2[%c0, %c0_1] : memref<16x204xf32, #tpu.memory_space<vmem>>, vector<16x204xf32>
    %c0_2 = arith.constant 0 : index
    %c0_3 = arith.constant 0 : index
    %4 = vector.load %arg3[%c0_2, %c0_3] : memref<16x204xf32, #tpu.memory_space<vmem>>, vector<16x204xf32>
    %5 = arith.subf %3, %4 : vector<16x204xf32>
    %c0_4 = arith.constant 0 : index
    %c0_5 = arith.constant 0 : index
    %6 = vector.load %arg4[%c0_4, %c0_5] : memref<204x128xbf16, #tpu.memory_space<vmem>>, vector<204x128xbf16>
    %7 = arith.truncf %3 : vector<16x204xf32> to vector<16x204xbf16>
    %8 = arith.extf %7 : vector<16x204xbf16> to vector<16x204xf32>
    %9 = arith.subf %3, %8 : vector<16x204xf32>
    %10 = arith.truncf %9 : vector<16x204xf32> to vector<16x204xbf16>
    %11 = arith.truncf %5 : vector<16x204xf32> to vector<16x204xbf16>
    %12 = arith.extf %11 : vector<16x204xbf16> to vector<16x204xf32>
    %13 = arith.subf %5, %12 : vector<16x204xf32>
    %14 = arith.truncf %13 : vector<16x204xf32> to vector<16x204xbf16>
    %cst = arith.constant dense<0.000000e+00> : vector<16x128xf32>
    %15 = tpu.matmul %7, %6, %cst {dimension_numbers = #tpu.dot_dimension_numbers<[1], [0], [0], [1], [0, 0, 1, 1], [], []>} : vector<16x204xbf16>, vector<204x128xbf16>, vector<16x128xf32> -> vector<16x128xf32>
    %cst_6 = arith.constant dense<0.000000e+00> : vector<16x128xf32>
    %16 = tpu.matmul %10, %6, %cst_6 {dimension_numbers = #tpu.dot_dimension_numbers<[1], [0], [0], [1], [0, 0, 1, 1], [], []>} : vector<16x204xbf16>, vector<204x128xbf16>, vector<16x128xf32> -> vector<16x128xf32>
    %17 = arith.addf %15, %16 : vector<16x128xf32>
    %cst_7 = arith.constant dense<0.000000e+00> : vector<16x128xf32>
    %18 = tpu.matmul %11, %6, %cst_7 {dimension_numbers = #tpu.dot_dimension_numbers<[1], [0], [0], [1], [0, 0, 1, 1], [], []>} : vector<16x204xbf16>, vector<204x128xbf16>, vector<16x128xf32> -> vector<16x128xf32>
    %cst_8 = arith.constant dense<0.000000e+00> : vector<16x128xf32>
    %19 = tpu.matmul %14, %6, %cst_8 {dimension_numbers = #tpu.dot_dimension_numbers<[1], [0], [0], [1], [0, 0, 1, 1], [], []>} : vector<16x204xbf16>, vector<204x128xbf16>, vector<16x128xf32> -> vector<16x128xf32>
    %20 = arith.addf %18, %19 : vector<16x128xf32>
    %21 = arith.mulf %17, %17 : vector<16x128xf32>
    %22 = arith.mulf %17, %20 : vector<16x128xf32>
    %23 = arith.mulf %5, %5 : vector<16x204xf32>
    %c0_9 = arith.constant 0 : index
    %c0_10 = arith.constant 0 : index
    %24 = vector.load %arg5[%c0_9, %c0_10] : memref<8x128xf32, #tpu.memory_space<vmem>>, vector<8x128xf32>
    %25 = vector.shape_cast %21 : vector<16x128xf32> to vector<2x8x128xf32>
    %cst_11 = arith.constant dense<0.000000e+00> : vector<8x128xf32>
    %26 = vector.multi_reduction <add>, %25, %cst_11 [0] : vector<2x8x128xf32> to vector<8x128xf32>
    %27 = arith.addf %24, %26 : vector<8x128xf32>
    %c0_12 = arith.constant 0 : index
    %c0_13 = arith.constant 0 : index
    %28 = vector.load %arg5[%c0_12, %c0_13] : memref<8x128xf32, #tpu.memory_space<vmem>>, vector<8x128xf32>
    tpu.vector_store %arg5[%c0_12, %c0_13], %27 {strides = array<i32>} : memref<8x128xf32, #tpu.memory_space<vmem>>, vector<8x128xf32>,
    %c0_14 = arith.constant 0 : index
    %c0_15 = arith.constant 0 : index
    %29 = vector.load %arg6[%c0_14, %c0_15] : memref<8x128xf32, #tpu.memory_space<vmem>>, vector<8x128xf32>
    %30 = vector.shape_cast %22 : vector<16x128xf32> to vector<2x8x128xf32>
    %cst_16 = arith.constant dense<0.000000e+00> : vector<8x128xf32>
    %31 = vector.multi_reduction <add>, %30, %cst_16 [0] : vector<2x8x128xf32> to vector<8x128xf32>
    %32 = arith.addf %29, %31 : vector<8x128xf32>
    %c0_17 = arith.constant 0 : index
    %c0_18 = arith.constant 0 : index
    %33 = vector.load %arg6[%c0_17, %c0_18] : memref<8x128xf32, #tpu.memory_space<vmem>>, vector<8x128xf32>
    tpu.vector_store %arg6[%c0_17, %c0_18], %32 {strides = array<i32>} : memref<8x128xf32, #tpu.memory_space<vmem>>, vector<8x128xf32>,
    %c0_19 = arith.constant 0 : index
    %c0_20 = arith.constant 0 : index
    %34 = vector.load %arg7[%c0_19, %c0_20] : memref<8x204xf32, #tpu.memory_space<vmem>>, vector<8x204xf32>
    %35 = vector.shape_cast %23 : vector<16x204xf32> to vector<2x8x204xf32>
    %cst_21 = arith.constant dense<0.000000e+00> : vector<8x204xf32>
    %36 = vector.multi_reduction <add>, %35, %cst_21 [0] : vector<2x8x204xf32> to vector<8x204xf32>
    %37 = arith.addf %34, %36 : vector<8x204xf32>
    %c0_22 = arith.constant 0 : index
    %c0_23 = arith.constant 0 : index
    %38 = vector.load %arg7[%c0_22, %c0_23] : memref<8x204xf32, #tpu.memory_space<vmem>>, vector<8x204xf32>
    tpu.vector_store %arg7[%c0_22, %c0_23], %37 {strides = array<i32>} : memref<8x204xf32, #tpu.memory_space<vmem>>, vector<8x204xf32>,
    return
  }
  func.func @transform_0(%arg0: i32, %arg1: i32) -> (i32, i32) {
    %c1_i32 = arith.constant 1 : i32
    %0 = arith.muli %arg0, %c1_i32 : i32
    %1 = arith.addi %0, %arg1 : i32
    %c0_i32 = arith.constant 0 : i32
    %2 = arith.minsi %1, %c0_i32 : i32
    %c0_i32_0 = arith.constant 0 : i32
    %c0_i32_1 = arith.constant 0 : i32
    return %2, %c0_i32_0 : i32, i32
  }
  func.func @transform_1(%arg0: i32, %arg1: i32) -> (i32, i32) {
    %c1_i32 = arith.constant 1 : i32
    %0 = arith.muli %arg0, %c1_i32 : i32
    %1 = arith.addi %0, %arg1 : i32
    %c0_i32 = arith.constant 0 : i32
    %2 = arith.minsi %1, %c0_i32 : i32
    %c0_i32_0 = arith.constant 0 : i32
    %c0_i32_1 = arith.constant 0 : i32
    return %2, %c0_i32_0 : i32, i32
  }
  func.func @transform_2(%arg0: i32, %arg1: i32) -> (i32, i32) {
    %c0_i32 = arith.constant 0 : i32
    %c0_i32_0 = arith.constant 0 : i32
    %c0_i32_1 = arith.constant 0 : i32
    return %c0_i32, %c0_i32_0 : i32, i32
  }
  func.func @transform_3(%arg0: i32, %arg1: i32) -> (i32, i32) {
    %c0_i32 = arith.constant 0 : i32
    %c0_i32_0 = arith.constant 0 : i32
    return %arg0, %c0_i32 : i32, i32
  }
  func.func @transform_4(%arg0: i32, %arg1: i32) -> (i32, i32) {
    %c0_i32 = arith.constant 0 : i32
    %c0_i32_0 = arith.constant 0 : i32
    return %arg0, %c0_i32 : i32, i32
  }
  func.func @transform_5(%arg0: i32, %arg1: i32) -> (i32, i32) {
    %c0_i32 = arith.constant 0 : i32
    %c0_i32_0 = arith.constant 0 : i32
    return %arg0, %c0_i32 : i32, i32
  }
}

</mosaic_0001>

<llo_original>
// kernel: tpu_custom_call.1
$region0: #{tpu_custom_call.1}
  #allocation0 [shape = 'u32[]', space=smem, size = 0x4, offset = 0x4, fixed_abs, tag = 'smem constant byte address 0x4 - core index']
  #allocation1 [shape = 'u32[144,128]{1,0:T(1,128)}', space=vmem, size = 0x12000, scoped, tag = 'internal scratch']
  %s0 = inlined_call_operand.hbm [shape: f32[16,204], index: 0, kind: input, shape index: {}]
  %s1 = inlined_call_operand.hbm [shape: f32[16,204], index: 1, kind: input, shape index: {}]
  %s2 = inlined_call_operand.hbm [shape: bf16[204,128], index: 2, kind: input, shape index: {}]
  %s3 = inlined_call_operand.hbm [shape: f32[8,128], index: 3, kind: output, shape index: {0}]
  %s4 = inlined_call_operand.hbm [shape: f32[8,128], index: 4, kind: output, shape index: {1}]
  %s5 = inlined_call_operand.hbm [shape: f32[8,204], index: 5, kind: output, shape index: {2}]
  %6 = xla_tuple %s3, %s4, %s5
  %s7 = sld [smem:[#allocation0]]
  $region54: #{tpu_custom_call.1} parent=0
    _
  %s9 = ssub.s32 1, %s7
  %s10 = scalar_select 0, %s9, %s7
  $region1: #{tpu_custom_call.1} parent=0
    #allocation2 [shape = 'u8[16384]{0}', space=vmem, size = 0x4000, scoped, tag = 'input window, operand 0, single buffered']
    #allocation3 [shape = 's32[1]{0}', space=sflag, size = 0x4, scoped, tag = 'scoped memory for tpu_custom_call.1']
    #allocation4 [shape = 's32[1]{0}', space=sflag, size = 0x4, scoped, tag = 'scoped memory for tpu_custom_call.1']
    #allocation5 [shape = 'u8[16384]{0}', space=vmem, size = 0x4000, scoped, tag = 'input window, operand 1, single buffered']
    #allocation6 [shape = 's32[1]{0}', space=sflag, size = 0x4, scoped, tag = 'scoped memory for tpu_custom_call.1']
    #allocation7 [shape = 'u8[53248]{0}', space=vmem, size = 0xd000, scoped, tag = 'input window, operand 2, single buffered']
    #allocation8 [shape = 'u8[4096]{0}', space=vmem, size = 0x1000, scoped, tag = 'output window, operand 0, single buffered']
    #allocation9 [shape = 'u8[4096]{0}', space=vmem, size = 0x1000, scoped, tag = 'output window, operand 1, single buffered']
    #allocation10 [shape = 's32[1]{0}', space=sflag, size = 0x4, scoped, tag = 'scoped memory for tpu_custom_call.1']
    #allocation11 [shape = 'u8[8192]{0}', space=vmem, size = 0x2000, scoped, tag = 'output window, operand 2, single buffered']
    %11 = vsyncpa [#allocation3], 0
    %12 = vsyncpa [#allocation6], 0
    %13 = vsyncpa [#allocation4], 0
    %14 = vsyncpa [#allocation10], 0
    // Predicated region
    $region2: #{tpu_custom_call.1} parent=1 // pred_check
      _
    $region3: #{tpu_custom_call.1} parent=1 // pred_check_branch
      %16 = sbr.rel (0) target = $region5
    $region4: #{tpu_custom_call.1} parent=1 // pred_region
      %s17 = sadd.s32 0, 0
      %p18 = scmp.lt.s32.totalorder %s17, 0
      %s19 = scalar_select %p18, %s17, 0
      %s20 = smul.u32 2, %s19
      %s22 = ssub.s32 512, 512
      %23 = vsyncadd [#allocation3], %s22
      %s24 = smul.addr %s20, 2
      %s25 = smul.addr %s24, 128
      %s26 = scalar_lea.hbm %s0, %s25
      %s27 = sshll.u32 [#allocation2], 4
      %s28 = int_to_ptr.vmem [resolvable:$true] %s27
      %33 = dma.hbm_to_vmem [thread:$0]  %s26, 512, %s28, [#allocation3], 256, 256, 16
    $region5: #{tpu_custom_call.1} parent=1 // pred_fallthru
      _
    // Predicated region
    $region6: #{tpu_custom_call.1} parent=1 // pred_check
      _
    $region7: #{tpu_custom_call.1} parent=1 // pred_check_branch
      %35 = sbr.rel (0) target = $region9
    $region8: #{tpu_custom_call.1} parent=1 // pred_region
      %s36 = sadd.s32 0, 0
      %p37 = scmp.lt.s32.totalorder %s36, 0
      %s38 = scalar_select %p37, %s36, 0
      %s39 = smul.u32 2, %s38
      %s41 = ssub.s32 512, 512
      %42 = vsyncadd [#allocation6], %s41
      %s43 = smul.addr %s39, 2
      %s44 = smul.addr %s43, 128
      %s45 = scalar_lea.hbm %s1, %s44
      %s46 = sshll.u32 [#allocation5], 4
      %s47 = int_to_ptr.vmem [resolvable:$true] %s46
      %52 = dma.hbm_to_vmem [thread:$0]  %s45, 512, %s47, [#allocation6], 256, 256, 16
    $region9: #{tpu_custom_call.1} parent=1 // pred_fallthru
      _
    // Predicated region
    $region10: #{tpu_custom_call.1} parent=1 // pred_check
      _
    $region11: #{tpu_custom_call.1} parent=1 // pred_check_branch
      %54 = sbr.rel (0) target = $region13
    $region12: #{tpu_custom_call.1} parent=1 // pred_region
      %s56 = ssub.s32 1664, 1664
      %57 = vsyncadd [#allocation6], %s56
      %s58 = sshll.u32 [#allocation7], 4
      %s59 = int_to_ptr.vmem [resolvable:$true] %s58
      %64 = dma.hbm_to_vmem [thread:$0]  %s2, 1664, %s59, [#allocation6], 64, 64, 4
    $region13: #{tpu_custom_call.1} parent=1 // pred_fallthru
      _
    // Predicated region
    $region14: #{tpu_custom_call.1} parent=1 // pred_check
      _
    $region15: #{tpu_custom_call.1} parent=1 // pred_check_branch
      %66 = sbr.rel (0) target = $region17
    $region16: #{tpu_custom_call.1} parent=1 // pred_region
      %67 = dma.done [#allocation3], 512
    $region17: #{tpu_custom_call.1} parent=1 // pred_fallthru
      _
    // Predicated region
    $region18: #{tpu_custom_call.1} parent=1 // pred_check
      _
    $region19: #{tpu_custom_call.1} parent=1 // pred_check_branch
      %69 = sbr.rel (0) target = $region21
    $region20: #{tpu_custom_call.1} parent=1 // pred_region
      %70 = dma.done [#allocation6], 512
    $region21: #{tpu_custom_call.1} parent=1 // pred_fallthru
      _
    // Predicated region
    $region22: #{tpu_custom_call.1} parent=1 // pred_check
      _
    $region23: #{tpu_custom_call.1} parent=1 // pred_check_branch
      %72 = sbr.rel (0) target = $region25
    $region24: #{tpu_custom_call.1} parent=1 // pred_region
      %73 = dma.done [#allocation6], 1664
    $region25: #{tpu_custom_call.1} parent=1 // pred_fallthru
      _
    %s74 = sadd.s32 0, 0
    %p75 = scmp.lt.s32.totalorder %s74, 0
    %s76 = scalar_select %p75, %s74, 0
    %s77 = smul.u32 2, %s76
    %s78 = sadd.s32 0, 0
    %p79 = scmp.lt.s32.totalorder %s78, 0
    %s80 = scalar_select %p79, %s78, 0
    %s81 = smul.u32 2, %s80
    %p83 = scmp.eq.s32.totalorder 0, 0
    // Predicated region
    $region26: #{tpu_custom_call.1} parent=1 // pred_check
      %p84 = pneg %p83
    $region27: #{tpu_custom_call.1} parent=1 // pred_check_branch
      %86 = sbr.rel (%p84) target = $region29
    $region28: #{tpu_custom_call.1} parent=1 // pred_region
      %87 = vst [vmem:[#allocation8] sm:$0xff] 0.0
      %88 = vst [vmem:[#allocation9] sm:$0xff] 0.0
      %89 = vst [vmem:[#allocation11] sm:$0xff] 0.0
      %vm90 = vcmask 621568
      %91 = vst.msk [vmem:[#allocation11 + $0x8] sm:$0xff] %vm90, 0.0
    $region29: #{tpu_custom_call.1} parent=1 // pred_fallthru
      _
    %v92 = vld [vmem:[#allocation2] sm:$0xff]
    %v93 = vld [vmem:[#allocation2 + $0x8] sm:$0xff]
    %v94 = vld [vmem:[#allocation2 + $0x10] sm:$0xff]
    %v95 = vld [vmem:[#allocation2 + $0x18] sm:$0xff]
    %v96 = vld [vmem:[#allocation5] sm:$0xff]
    %v97 = vld [vmem:[#allocation5 + $0x8] sm:$0xff]
    %v98 = vld [vmem:[#allocation5 + $0x10] sm:$0xff]
    %v99 = vld [vmem:[#allocation5 + $0x18] sm:$0xff]
    %v100 = vsub.f32 %v92, %v96
    %v101 = vsub.f32 %v93, %v97
    %v102 = vsub.f32 %v94, %v98
    %v103 = vsub.f32 %v95, %v99
    %v104 = vld [vmem:[#allocation7] sm:$0xf]
    %v105 = vld [vmem:[#allocation7 + $0x4] sm:$0xf]
    %v106 = vld [vmem:[#allocation7 + $0x8] sm:$0xf]
    %v107 = vld [vmem:[#allocation7 + $0xc] sm:$0xf]
    %v108 = vld [vmem:[#allocation7 + $0x10] sm:$0xf]
    %v109 = vld [vmem:[#allocation7 + $0x14] sm:$0xf]
    %v110 = vld [vmem:[#allocation7 + $0x18] sm:$0xf]
    %v111 = vld [vmem:[#allocation7 + $0x1c] sm:$0xf]
    %v112 = vld [vmem:[#allocation7 + $0x20] sm:$0xf]
    %v113 = vld [vmem:[#allocation7 + $0x24] sm:$0xf]
    %v114 = vld [vmem:[#allocation7 + $0x28] sm:$0xf]
    %v115 = vld [vmem:[#allocation7 + $0x2c] sm:$0xf]
    %v116 = vld [vmem:[#allocation7 + $0x30] sm:$0xf]
    %v117 = vld [vmem:[#allocation7 + $0x34] sm:$0xf]
    %v118 = vld [vmem:[#allocation7 + $0x38] sm:$0xf]
    %v119 = vld [vmem:[#allocation7 + $0x3c] sm:$0xf]
    %v120 = vld [vmem:[#allocation7 + $0x40] sm:$0xf]
    %v121 = vld [vmem:[#allocation7 + $0x44] sm:$0xf]
    %v122 = vld [vmem:[#allocation7 + $0x48] sm:$0xf]
    %v123 = vld [vmem:[#allocation7 + $0x4c] sm:$0xf]
    %v124 = vld [vmem:[#allocation7 + $0x50] sm:$0xf]
    %v125 = vld [vmem:[#allocation7 + $0x54] sm:$0xf]
    %v126 = vld [vmem:[#allocation7 + $0x58] sm:$0xf]
    %v127 = vld [vmem:[#allocation7 + $0x5c] sm:$0xf]
    %v128 = vld [vmem:[#allocation7 + $0x60] sm:$0xf]
    %v129 = vld [vmem:[#allocation7 + $0x64] sm:$0x3]
    %v130 = vpack.c.bf16 %v94, %v92
    %v131 = vpack.c.bf16 %v95, %v93
    %v132 = vunpack.c.l.bf16 %v130
    %v133 = vunpack.c.l.bf16 %v131
    %v134 = vunpack.c.h.bf16 %v130
    %v135 = vunpack.c.h.bf16 %v131
    %v136 = vsub.f32 %v92, %v132
    %v137 = vsub.f32 %v93, %v133
    %v138 = vsub.f32 %v94, %v134
    %v139 = vsub.f32 %v95, %v135
    %v140 = vpack.c.bf16 %v138, %v136
    %v141 = vpack.c.bf16 %v139, %v137
    %v142 = vpack.c.bf16 %v102, %v100
    %v143 = vpack.c.bf16 %v103, %v101
    %v144 = vunpack.c.l.bf16 %v142
    %v145 = vunpack.c.l.bf16 %v143
    %v146 = vunpack.c.h.bf16 %v142
    %v147 = vunpack.c.h.bf16 %v143
    %v148 = vsub.f32 %v100, %v144
    %v149 = vsub.f32 %v101, %v145
    %v150 = vsub.f32 %v102, %v146
    %v151 = vsub.f32 %v103, %v147
    %v152 = vpack.c.bf16 %v150, %v148
    %v153 = vpack.c.bf16 %v151, %v149
    %v180 = vunpack.c.l.b16 %v104
    %v181 = vunpack.c.l.b16 %v105
    %v182 = vunpack.c.l.b16 %v106
    %v183 = vunpack.c.l.b16 %v107
    %v184 = vunpack.c.l.b16 %v108
    %v185 = vunpack.c.l.b16 %v109
    %v186 = vunpack.c.l.b16 %v110
    %v187 = vunpack.c.l.b16 %v111
    %v188 = vunpack.c.l.b16 %v112
    %v189 = vunpack.c.l.b16 %v113
    %v190 = vunpack.c.l.b16 %v114
    %v191 = vunpack.c.l.b16 %v115
    %v192 = vunpack.c.l.b16 %v116
    %v193 = vunpack.c.l.b16 %v117
    %v194 = vunpack.c.l.b16 %v118
    %v195 = vunpack.c.l.b16 %v119
    %v196 = vunpack.c.l.b16 %v120
    %v197 = vunpack.c.l.b16 %v121
    %v198 = vunpack.c.l.b16 %v122
    %v199 = vunpack.c.l.b16 %v123
    %v200 = vunpack.c.l.b16 %v124
    %v201 = vunpack.c.l.b16 %v125
    %v202 = vunpack.c.l.b16 %v126
    %v203 = vunpack.c.l.b16 %v127
    %v204 = vunpack.c.l.b16 %v128
    %v205 = vunpack.c.l.b16 %v129
    %v206 = vpack.c.b16 %v181, %v180
    %v207 = vpack.c.b16 %v183, %v182
    %v208 = vpack.c.b16 %v185, %v184
    %v209 = vpack.c.b16 %v187, %v186
    %v210 = vpack.c.b16 %v189, %v188
    %v211 = vpack.c.b16 %v191, %v190
    %v212 = vpack.c.b16 %v193, %v192
    %v213 = vpack.c.b16 %v195, %v194
    %v214 = vpack.c.b16 %v197, %v196
    %v215 = vpack.c.b16 %v199, %v198
    %v216 = vpack.c.b16 %v201, %v200
    %v217 = vpack.c.b16 %v203, %v202
    %v218 = vpack.c.b16 %v205, %v204
    %vm231 = vcmask 621568
    %v233 = vsel %vm231, %v141, 0
    %vm235 = vcmask 1045504
    %v237 = vsel %vm235, %v218, 0
    %239 = vmatprep.subr.bf16.mxu0 0
    %240 = vmatpush1.bf16.msra.mxu0 %v213
    %241 = vmatprep.subr.bf16.mxu0 0
    %242 = vmatpush1.bf16.msra.mxu0 %v212
    %243 = vmatprep.subr.bf16.mxu0 0
    %244 = vmatpush1.bf16.msra.mxu0 %v211
    %245 = vmatprep.subr.bf16.mxu0 0
    %246 = vmatpush1.bf16.msra.mxu0 %v210
    %247 = vmatprep.subr.bf16.mxu0 0
    %248 = vmatpush1.bf16.msra.mxu0 %v209
    %249 = vmatprep.subr.bf16.mxu0 0
    %250 = vmatpush1.bf16.msra.mxu0 %v208
    %251 = vmatprep.subr.bf16.mxu0 0
    %252 = vmatpush1.bf16.msra.mxu0 %v207
    %253 = vmatprep.subr.bf16.mxu0 0
    %254 = vmatpush1.bf16.msra.mxu0 %v206
    %255 = vmatprep.subr.bf16.mxu0 0
    %256 = vmatpush2.bf16.msra.mxu0 0
    %257 = vmatprep.subr.bf16.mxu0 0
    %258 = vmatpush2.bf16.msra.mxu0 0
    %259 = vmatprep.subr.bf16.mxu0 0
    %260 = vmatpush2.bf16.msra.mxu0 0
    %261 = vmatprep.subr.bf16.mxu0 0
    %262 = vmatpush2.bf16.msra.mxu0 %v237
    %263 = vmatprep.subr.bf16.mxu0 0
    %264 = vmatpush2.bf16.msra.mxu0 %v217
    %265 = vmatprep.subr.bf16.mxu0 0
    %266 = vmatpush2.bf16.msra.mxu0 %v216
    %267 = vmatprep.subr.bf16.mxu0 0
    %268 = vmatpush2.bf16.msra.mxu0 %v215
    %269 = vmatprep.subr.bf16.mxu0 0
    %270 = vmatpush2.bf16.msra.mxu0 %v214
    %271 = vmatprep.mubr.bf16.mxu0 %v233
    %272 = vmatmul.mubr.bf16.gmra.mxu0 %v140
    %v273 = vpop.f32.mrf.mxu0
    %v274 = vadd.f32 0.0, %v273
    %v275 = vpop.f32.mrf.mxu0
    %v276 = vpop.f32.mrf.mxu0
    %v277 = vadd.f32 0.0, %v276
    %v278 = vpop.f32.mrf.mxu0
    %279 = vdwg.mxu0
    %v281 = vsel %vm231, %v131, 0
    %283 = vmatprep.subr.bf16.mxu0 0
    %284 = vmatpush1.bf16.msra.mxu0 %v213
    %285 = vmatprep.subr.bf16.mxu0 0
    %286 = vmatpush1.bf16.msra.mxu0 %v212
    %287 = vmatprep.subr.bf16.mxu0 0
    %288 = vmatpush1.bf16.msra.mxu0 %v211
    %289 = vmatprep.subr.bf16.mxu0 0
    %290 = vmatpush1.bf16.msra.mxu0 %v210
    %291 = vmatprep.subr.bf16.mxu0 0
    %292 = vmatpush1.bf16.msra.mxu0 %v209
    %293 = vmatprep.subr.bf16.mxu0 0
    %294 = vmatpush1.bf16.msra.mxu0 %v208
    %295 = vmatprep.subr.bf16.mxu0 0
    %296 = vmatpush1.bf16.msra.mxu0 %v207
    %297 = vmatprep.subr.bf16.mxu0 0
    %298 = vmatpush1.bf16.msra.mxu0 %v206
    %299 = vmatprep.subr.bf16.mxu0 0
    %300 = vmatpush2.bf16.msra.mxu0 0
    %301 = vmatprep.subr.bf16.mxu0 0
    %302 = vmatpush2.bf16.msra.mxu0 0
    %303 = vmatprep.subr.bf16.mxu0 0
    %304 = vmatpush2.bf16.msra.mxu0 0
    %305 = vmatprep.subr.bf16.mxu0 0
    %306 = vmatpush2.bf16.msra.mxu0 %v237
    %307 = vmatprep.subr.bf16.mxu0 0
    %308 = vmatpush2.bf16.msra.mxu0 %v217
    %309 = vmatprep.subr.bf16.mxu0 0
    %310 = vmatpush2.bf16.msra.mxu0 %v216
    %311 = vmatprep.subr.bf16.mxu0 0
    %312 = vmatpush2.bf16.msra.mxu0 %v215
    %313 = vmatprep.subr.bf16.mxu0 0
    %314 = vmatpush2.bf16.msra.mxu0 %v214
    %315 = vmatprep.mubr.bf16.mxu0 %v281
    %316 = vmatmul.mubr.bf16.gmra.mxu0 %v130
    %v317 = vpop.f32.mrf.mxu0
    %v318 = vadd.f32 %v274, %v317
    %v319 = vpop.f32.mrf.mxu0
    %v320 = vpop.f32.mrf.mxu0
    %v321 = vadd.f32 %v277, %v320
    %v322 = vpop.f32.mrf.mxu0
    %323 = vdwg.mxu0
    %v325 = vsel %vm231, %v153, 0
    %327 = vmatprep.subr.bf16.mxu0 0
    %328 = vmatpush1.bf16.msra.mxu0 %v213
    %329 = vmatprep.subr.bf16.mxu0 0
    %330 = vmatpush1.bf16.msra.mxu0 %v212
    %331 = vmatprep.subr.bf16.mxu0 0
    %332 = vmatpush1.bf16.msra.mxu0 %v211
    %333 = vmatprep.subr.bf16.mxu0 0
    %334 = vmatpush1.bf16.msra.mxu0 %v210
    %335 = vmatprep.subr.bf16.mxu0 0
    %336 = vmatpush1.bf16.msra.mxu0 %v209
    %337 = vmatprep.subr.bf16.mxu0 0
    %338 = vmatpush1.bf16.msra.mxu0 %v208
    %339 = vmatprep.subr.bf16.mxu0 0
    %340 = vmatpush1.bf16.msra.mxu0 %v207
    %341 = vmatprep.subr.bf16.mxu0 0
    %342 = vmatpush1.bf16.msra.mxu0 %v206
    %343 = vmatprep.subr.bf16.mxu0 0
    %344 = vmatpush2.bf16.msra.mxu0 0
    %345 = vmatprep.subr.bf16.mxu0 0
    %346 = vmatpush2.bf16.msra.mxu0 0
    %347 = vmatprep.subr.bf16.mxu0 0
    %348 = vmatpush2.bf16.msra.mxu0 0
    %349 = vmatprep.subr.bf16.mxu0 0
    %350 = vmatpush2.bf16.msra.mxu0 %v237
    %351 = vmatprep.subr.bf16.mxu0 0
    %352 = vmatpush2.bf16.msra.mxu0 %v217
    %353 = vmatprep.subr.bf16.mxu0 0
    %354 = vmatpush2.bf16.msra.mxu0 %v216
    %355 = vmatprep.subr.bf16.mxu0 0
    %356 = vmatpush2.bf16.msra.mxu0 %v215
    %357 = vmatprep.subr.bf16.mxu0 0
    %358 = vmatpush2.bf16.msra.mxu0 %v214
    %359 = vmatprep.mubr.bf16.mxu0 %v325
    %360 = vmatmul.mubr.bf16.gmra.mxu0 %v152
    %v361 = vpop.f32.mrf.mxu0
    %v362 = vadd.f32 0.0, %v361
    %v363 = vpop.f32.mrf.mxu0
    %v364 = vpop.f32.mrf.mxu0
    %v365 = vadd.f32 0.0, %v364
    %v366 = vpop.f32.mrf.mxu0
    %367 = vdwg.mxu0
    %v369 = vsel %vm231, %v143, 0
    %371 = vmatprep.subr.bf16.mxu0 0
    %372 = vmatpush1.bf16.msra.mxu0 %v213
    %373 = vmatprep.subr.bf16.mxu0 0
    %374 = vmatpush1.bf16.msra.mxu0 %v212
    %375 = vmatprep.subr.bf16.mxu0 0
    %376 = vmatpush1.bf16.msra.mxu0 %v211
    %377 = vmatprep.subr.bf16.mxu0 0
    %378 = vmatpush1.bf16.msra.mxu0 %v210
    %379 = vmatprep.subr.bf16.mxu0 0
    %380 = vmatpush1.bf16.msra.mxu0 %v209
    %381 = vmatprep.subr.bf16.mxu0 0
    %382 = vmatpush1.bf16.msra.mxu0 %v208
    %383 = vmatprep.subr.bf16.mxu0 0
    %384 = vmatpush1.bf16.msra.mxu0 %v207
    %385 = vmatprep.subr.bf16.mxu0 0
    %386 = vmatpush1.bf16.msra.mxu0 %v206
    %387 = vmatprep.subr.bf16.mxu0 0
    %388 = vmatpush2.bf16.msra.mxu0 0
    %389 = vmatprep.subr.bf16.mxu0 0
    %390 = vmatpush2.bf16.msra.mxu0 0
    %391 = vmatprep.subr.bf16.mxu0 0
    %392 = vmatpush2.bf16.msra.mxu0 0
    %393 = vmatprep.subr.bf16.mxu0 0
    %394 = vmatpush2.bf16.msra.mxu0 %v237
    %395 = vmatprep.subr.bf16.mxu0 0
    %396 = vmatpush2.bf16.msra.mxu0 %v217
    %397 = vmatprep.subr.bf16.mxu0 0
    %398 = vmatpush2.bf16.msra.mxu0 %v216
    %399 = vmatprep.subr.bf16.mxu0 0
    %400 = vmatpush2.bf16.msra.mxu0 %v215
    %401 = vmatprep.subr.bf16.mxu0 0
    %402 = vmatpush2.bf16.msra.mxu0 %v214
    %403 = vmatprep.mubr.bf16.mxu0 %v369
    %404 = vmatmul.mubr.bf16.gmra.mxu0 %v142
    %v405 = vpop.f32.mrf.mxu0
    %v406 = vadd.f32 %v362, %v405
    %v407 = vpop.f32.mrf.mxu0
    %v408 = vpop.f32.mrf.mxu0
    %v409 = vadd.f32 %v365, %v408
    %v410 = vpop.f32.mrf.mxu0
    %411 = vdwg.mxu0
    %v412 = vmul.f32 %v318, %v318
    %v413 = vmul.f32 %v321, %v321
    %v414 = vmul.f32 %v318, %v406
    %v415 = vmul.f32 %v321, %v409
    %v416 = vmul.f32 %v100, %v100
    %v417 = vmul.f32 %v101, %v101
    %v418 = vmul.f32 %v102, %v102
    %v419 = vmul.f32 %v103, %v103
    %v420 = vld [vmem:[#allocation8] sm:$0xff]
    %v421 = vadd.f32 %v412, %v413
    %v422 = vadd.f32 %v420, %v421
    %423 = vst [vmem:[#allocation8] sm:$0xff] %v422
    %v424 = vld [vmem:[#allocation9] sm:$0xff]
    %v425 = vadd.f32 %v414, %v415
    %v426 = vadd.f32 %v424, %v425
    %427 = vst [vmem:[#allocation9] sm:$0xff] %v426
    %v428 = vld [vmem:[#allocation11] sm:$0xff]
    %v429 = vld [vmem:[#allocation11 + $0x8] sm:$0xff]
    %v430 = vadd.f32 %v416, %v418
    %v431 = vsel %vm231, %v417, 0.0
    %v432 = vsel %vm231, %v419, 0.0
    %v433 = vadd.f32 %v431, %v432
    %v434 = vadd.f32 %v428, %v430
    %v435 = vadd.f32 %v429, %v433
    %436 = vst [vmem:[#allocation11] sm:$0xff] %v434
    %437 = vst.msk [vmem:[#allocation11 + $0x8] sm:$0xff] %vm231, %v435
    // Predicated region
    $region30: #{tpu_custom_call.1} parent=1 // pred_check
      _
    $region31: #{tpu_custom_call.1} parent=1 // pred_check_branch
      %439 = sbr.rel (0) target = $region33
    $region32: #{tpu_custom_call.1} parent=1 // pred_region
      %s441 = ssub.s32 128, 128
      %442 = vsyncadd [#allocation4], %s441
      %s444 = sshll.u32 [#allocation8], 4
      %s445 = int_to_ptr.vmem [resolvable:$true] %s444
      %447 = dma.vmem_to_hbm [thread:$0]  %s445, 128, %s3, [#allocation4]
    $region33: #{tpu_custom_call.1} parent=1 // pred_fallthru
      _
    // Predicated region
    $region34: #{tpu_custom_call.1} parent=1 // pred_check
      _
    $region35: #{tpu_custom_call.1} parent=1 // pred_check_branch
      %449 = sbr.rel (0) target = $region37
    $region36: #{tpu_custom_call.1} parent=1 // pred_region
      %s451 = ssub.s32 128, 128
      %452 = vsyncadd [#allocation10], %s451
      %s454 = sshll.u32 [#allocation9], 4
      %s455 = int_to_ptr.vmem [resolvable:$true] %s454
      %457 = dma.vmem_to_hbm [thread:$0]  %s455, 128, %s4, [#allocation10]
    $region37: #{tpu_custom_call.1} parent=1 // pred_fallthru
      _
    // Predicated region
    $region38: #{tpu_custom_call.1} parent=1 // pred_check
      _
    $region39: #{tpu_custom_call.1} parent=1 // pred_check_branch
      %459 = sbr.rel (0) target = $region41
    $region40: #{tpu_custom_call.1} parent=1 // pred_region
      %s461 = ssub.s32 256, 256
      %462 = vsyncadd [#allocation10], %s461
      %s464 = sshll.u32 [#allocation11], 4
      %s465 = int_to_ptr.vmem [resolvable:$true] %s464
      %467 = dma.vmem_to_hbm [thread:$0]  %s465, 256, %s5, [#allocation10]
    $region41: #{tpu_custom_call.1} parent=1 // pred_fallthru
      _
    // Predicated region
    $region42: #{tpu_custom_call.1} parent=1 // pred_check
      _
    $region43: #{tpu_custom_call.1} parent=1 // pred_check_branch
      %469 = sbr.rel (0) target = $region45
    $region44: #{tpu_custom_call.1} parent=1 // pred_region
      %470 = dma.done [#allocation4], 128
    $region45: #{tpu_custom_call.1} parent=1 // pred_fallthru
      _
    // Predicated region
    $region46: #{tpu_custom_call.1} parent=1 // pred_check
      _
    $region47: #{tpu_custom_call.1} parent=1 // pred_check_branch
      %472 = sbr.rel (0) target = $region49
    $region48: #{tpu_custom_call.1} parent=1 // pred_region
      %473 = dma.done [#allocation10], 128
    $region49: #{tpu_custom_call.1} parent=1 // pred_fallthru
      _
    // Predicated region
    $region50: #{tpu_custom_call.1} parent=1 // pred_check
      _
    $region51: #{tpu_custom_call.1} parent=1 // pred_check_branch
      %475 = sbr.rel (0) target = $region53
    $region52: #{tpu_custom_call.1} parent=1 // pred_region
      %476 = dma.done [#allocation10], 256
    $region53: #{tpu_custom_call.1} parent=1 // pred_fallthru
      _
    %477 = vsyncpa [#allocation3], 1
    %478 = vsyncpa [#allocation6], 1
    %479 = vsyncpa [#allocation4], 1
    %480 = vsyncpa [#allocation10], 1

</llo_original>
